<compile_context>
chip_gen: v5e
topology: v5e:2x2
jax: 0.10.0
libtpu: 0.0.40
codegen_flags: <defaults>
</compile_context>

<pallas_src>
import jax
import jax.numpy as jnp
from jax.experimental import pallas as pl
from jax.experimental.pallas import tpu as pltpu

D_IN, D_H1, D_H2, D_H3, D_OUT = 49, 196, 392, 196, 10
# Lane-aligned padded dims (multiples of 128) for the *output* side of each layer.
D_H1_P, D_H2_P, D_H3_P, D_OUT_P = 256, 512, 256, 128


def _mlp_kernel(x_ref,
                w1_ref, b1_ref,
                w2_ref, b2_ref,
                w3_ref, b3_ref,
                w4_ref, b4_ref,
                o_ref):
    # Fused 4-layer MLP on one batch tile.
    # MXU: bf16 x bf16 with f32 accumulation; VPU: f32 bias add + ReLU.
    f32, bf16 = jnp.float32, jnp.bfloat16

    h = jnp.dot(x_ref[...].astype(bf16), w1_ref[...], preferred_element_type=f32)
    h = jnp.maximum(h + b1_ref[...], 0.0)

    h = jnp.dot(h.astype(bf16), w2_ref[...], preferred_element_type=f32)
    h = jnp.maximum(h + b2_ref[...], 0.0)

    h = jnp.dot(h.astype(bf16), w3_ref[...], preferred_element_type=f32)
    h = jnp.maximum(h + b3_ref[...], 0.0)

    o_ref[...] = jnp.dot(h.astype(bf16), w4_ref[...], preferred_element_type=f32) + b4_ref[...]


def _pad2(a, rows, cols, dtype):
    a = a.astype(dtype)
    return jnp.pad(a, ((0, rows - a.shape[0]), (0, cols - a.shape[1])))


def prepare_params(params):
    """One-time preprocessing: pad to lane-dense shapes, weights -> bf16, biases -> f32.

    Hoisted out of the per-call forward so the forward pass is just the pallas_call.
    Weights stored [in, out]; only the output dim (and hidden input dims) are padded.
    """
    return dict(
        w1=_pad2(params["w1"], D_IN, D_H1_P, jnp.bfloat16),     # (49, 256)
        w2=_pad2(params["w2"], D_H1_P, D_H2_P, jnp.bfloat16),    # (256, 512)
        w3=_pad2(params["w3"], D_H2_P, D_H3_P, jnp.bfloat16),    # (512, 256)
        w4=_pad2(params["w4"], D_H3_P, D_OUT_P, jnp.bfloat16),   # (256, 128)
        b1=_pad2(params["b1"], 1, D_H1_P, jnp.float32),
        b2=_pad2(params["b2"], 1, D_H2_P, jnp.float32),
        b3=_pad2(params["b3"], 1, D_H3_P, jnp.float32),
        b4=_pad2(params["b4"], 1, D_OUT_P, jnp.float32),
    )


def _choose_tb(B, tb):
    """Batch tile: sublane-aligned; >= 2 grid steps when B is large enough (v7x megacore)."""
    if B <= 8:
        return 8
    half = -(-B // 2)                     # ceil(B/2)
    half = ((half + 7) // 8) * 8          # round up to sublane multiple
    return max(8, min(tb, half))


def dimen_reduct_forward(x, prepared, *, tb=512):
    """x: [B, 49] float32. prepared: output of prepare_params()."""
    B = x.shape[0]
    TB = _choose_tb(B, tb)
    B_pad = ((B + TB - 1) // TB) * TB
    grid = (B_pad // TB,)

    if B_pad != B:
        x = jnp.pad(x, ((0, B_pad - B), (0, 0)))

    # Weights/biases: constant block index -> fetched once, VMEM-resident across grid steps.
    resident = lambda shape: pl.BlockSpec(shape, lambda i: (0, 0))
    in_specs = [
        pl.BlockSpec((TB, D_IN), lambda i: (i, 0)),            # x tiled over batch (full 49-lane dim)
        resident((D_IN, D_H1_P)), resident((1, D_H1_P)),
        resident((D_H1_P, D_H2_P)), resident((1, D_H2_P)),
        resident((D_H2_P, D_H3_P)), resident((1, D_H3_P)),
        resident((D_H3_P, D_OUT_P)), resident((1, D_OUT_P)),
    ]
    out_spec = pl.BlockSpec((TB, D_OUT_P), lambda i: (i, 0))

    # Cost estimate reflecting padded work / actual streamed bytes (advisory for XLA scheduling).
    flops = 2 * B_pad * (128 * D_H1_P + D_H1_P * D_H2_P + D_H2_P * D_H3_P + D_H3_P * D_OUT_P)
    weight_bytes = 2 * (D_IN * D_H1_P + D_H1_P * D_H2_P + D_H2_P * D_H3_P + D_H3_P * D_OUT_P)
    bias_bytes = 4 * (D_H1_P + D_H2_P + D_H3_P + D_OUT_P)
    io_bytes = 4 * B_pad * (D_IN + D_OUT_P)
    cost = pl.CostEstimate(flops=flops, transcendentals=0,
                           bytes_accessed=weight_bytes + bias_bytes + io_bytes)

    out = pl.pallas_call(
        _mlp_kernel,
        out_shape=jax.ShapeDtypeStruct((B_pad, D_OUT_P), jnp.float32),
        grid=grid,
        in_specs=in_specs,
        out_specs=out_spec,
        compiler_params=pltpu.CompilerParams(
            dimension_semantics=("parallel",),   # v7x: shard batch tiles across both TCs
            vmem_limit_bytes=16 << 20,           # footprint ~5 MiB at TB=512; ample headroom
        ),
        cost_estimate=cost,
    )(x, prepared["w1"], prepared["b1"], prepared["w2"], prepared["b2"],
      prepared["w3"], prepared["b3"], prepared["w4"], prepared["b4"])
    return out[:B, :D_OUT]


def init_params(key):
    """Deterministic synthetic init; weights stored [in, out], biases [1, out]."""
    ks = jax.random.split(key, 8)
    def lin(kw, kb, fin, fout):
        bound = 1.0 / jnp.sqrt(jnp.float32(fin))
        w = jax.random.uniform(kw, (fin, fout), jnp.float32, -bound, bound)
        b = jax.random.uniform(kb, (1, fout), jnp.float32, -bound, bound)
        return w, b
    w1, b1 = lin(ks[0], ks[1], D_IN, D_H1)
    w2, b2 = lin(ks[2], ks[3], D_H1, D_H2)
    w3, b3 = lin(ks[4], ks[5], D_H2, D_H3)
    w4, b4 = lin(ks[6], ks[7], D_H3, D_OUT)
    return dict(w1=w1, b1=b1, w2=w2, b2=b2, w3=w3, b3=b3, w4=w4, b4=b4)


def reference_forward(x, p):
    # Reference applies the same bf16 rounding (weights AND activation matmul
    # inputs) with f32 accumulation — apples-to-apples with the kernel.
    f32, bf16 = jnp.float32, jnp.bfloat16
    def lin(h, w, b):
        return jnp.dot(h.astype(bf16), w.astype(bf16), preferred_element_type=f32) + b
    h = jnp.maximum(lin(x, p["w1"], p["b1"]), 0.0)
    h = jnp.maximum(lin(h, p["w2"], p["b2"]), 0.0)
    h = jnp.maximum(lin(h, p["w3"], p["b3"]), 0.0)
    return lin(h, p["w4"], p["b4"])


if __name__ == "__main__":
    key = jax.random.PRNGKey(0)
    k_x, k_p = jax.random.split(key)
    B = 8
    # Input mimics the flattened 7x7 encoder output of the Autoencoder (49 features in [0,1]).
    x = jax.random.uniform(k_x, (B, D_IN), jnp.float32)
    params = init_params(k_p)
    prepared = prepare_params(params)          # one-time, hoisted out of the forward pass

    out = dimen_reduct_forward(x, prepared)
    out = jax.block_until_ready(out)

    ref = reference_forward(x, params)
    assert out.shape == (B, D_OUT)
    assert jnp.allclose(out, ref, atol=1e-2, rtol=1e-2), "mismatch vs reference"
    print("KERNEL_OK")
</pallas_src>

<mosaic_0001>
module attributes {stable_mosaic.version = 11 : i64} {
  func.func @_mlp_kernel(%arg0: i32, %arg1: memref<8x49xf32, #tpu.memory_space<vmem>>, %arg2: memref<49x256xbf16, #tpu.memory_space<vmem>>, %arg3: memref<1x256xf32, #tpu.memory_space<vmem>>, %arg4: memref<256x512xbf16, #tpu.memory_space<vmem>>, %arg5: memref<1x512xf32, #tpu.memory_space<vmem>>, %arg6: memref<512x256xbf16, #tpu.memory_space<vmem>>, %arg7: memref<1x256xf32, #tpu.memory_space<vmem>>, %arg8: memref<256x128xbf16, #tpu.memory_space<vmem>>, %arg9: memref<1x128xf32, #tpu.memory_space<vmem>>, %arg10: memref<8x128xf32, #tpu.memory_space<vmem>>) attributes {dimension_semantics = [#tpu.dimension_semantics<parallel>], iteration_bounds = array<i64: 1>, scalar_prefetch = 0 : i64, scratch_operands = 0 : i64, tpu.core_type = #tpu.core_type<tc>, window_params = [{transform_indices = @transform_0, window_bounds = array<i64: 8, 49>}, {pipeline_mode = #tpu.pipeline_mode<synchronous>, transform_indices = @transform_1, window_bounds = array<i64: 49, 256>}, {pipeline_mode = #tpu.pipeline_mode<synchronous>, transform_indices = @transform_2, window_bounds = array<i64: 1, 256>}, {pipeline_mode = #tpu.pipeline_mode<synchronous>, transform_indices = @transform_3, window_bounds = array<i64: 256, 512>}, {pipeline_mode = #tpu.pipeline_mode<synchronous>, transform_indices = @transform_4, window_bounds = array<i64: 1, 512>}, {pipeline_mode = #tpu.pipeline_mode<synchronous>, transform_indices = @transform_5, window_bounds = array<i64: 512, 256>}, {pipeline_mode = #tpu.pipeline_mode<synchronous>, transform_indices = @transform_6, window_bounds = array<i64: 1, 256>}, {pipeline_mode = #tpu.pipeline_mode<synchronous>, transform_indices = @transform_7, window_bounds = array<i64: 256, 128>}, {pipeline_mode = #tpu.pipeline_mode<synchronous>, transform_indices = @transform_8, window_bounds = array<i64: 1, 128>}, {transform_indices = @transform_9, window_bounds = array<i64: 8, 128>}]} {
    %c0 = arith.constant 0 : index
    %c0_0 = arith.constant 0 : index
    %0 = vector.load %arg1[%c0, %c0_0] : memref<8x49xf32, #tpu.memory_space<vmem>>, vector<8x49xf32>
    %1 = arith.truncf %0 : vector<8x49xf32> to vector<8x49xbf16>
    %c0_1 = arith.constant 0 : index
    %c0_2 = arith.constant 0 : index
    %2 = vector.load %arg2[%c0_1, %c0_2] : memref<49x256xbf16, #tpu.memory_space<vmem>>, vector<49x256xbf16>
    %cst = arith.constant dense<0.000000e+00> : vector<8x256xf32>
    %3 = tpu.matmul %1, %2, %cst {dimension_numbers = #tpu.dot_dimension_numbers<[1], [0], [0], [1], [0, 0, 1, 1], [], []>} : vector<8x49xbf16>, vector<49x256xbf16>, vector<8x256xf32> -> vector<8x256xf32>
    %c0_3 = arith.constant 0 : index
    %c0_4 = arith.constant 0 : index
    %4 = vector.load %arg3[%c0_3, %c0_4] : memref<1x256xf32, #tpu.memory_space<vmem>>, vector<1x256xf32>
    %5 = vector.broadcast %4 : vector<1x256xf32> to vector<8x256xf32>
    %6 = arith.addf %3, %5 : vector<8x256xf32>
    %cst_5 = arith.constant 0.000000e+00 : f32
    %7 = vector.broadcast %cst_5 : f32 to vector<8x256xf32>
    %8 = arith.maximumf %6, %7 : vector<8x256xf32>
    %9 = arith.truncf %8 : vector<8x256xf32> to vector<8x256xbf16>
    %c0_6 = arith.constant 0 : index
    %c0_7 = arith.constant 0 : index
    %10 = vector.load %arg4[%c0_6, %c0_7] : memref<256x512xbf16, #tpu.memory_space<vmem>>, vector<256x512xbf16>
    %cst_8 = arith.constant dense<0.000000e+00> : vector<8x512xf32>
    %11 = tpu.matmul %9, %10, %cst_8 {dimension_numbers = #tpu.dot_dimension_numbers<[1], [0], [0], [1], [0, 0, 1, 1], [], []>} : vector<8x256xbf16>, vector<256x512xbf16>, vector<8x512xf32> -> vector<8x512xf32>
    %c0_9 = arith.constant 0 : index
    %c0_10 = arith.constant 0 : index
    %12 = vector.load %arg5[%c0_9, %c0_10] : memref<1x512xf32, #tpu.memory_space<vmem>>, vector<1x512xf32>
    %13 = vector.broadcast %12 : vector<1x512xf32> to vector<8x512xf32>
    %14 = arith.addf %11, %13 : vector<8x512xf32>
    %cst_11 = arith.constant 0.000000e+00 : f32
    %15 = vector.broadcast %cst_11 : f32 to vector<8x512xf32>
    %16 = arith.maximumf %14, %15 : vector<8x512xf32>
    %17 = arith.truncf %16 : vector<8x512xf32> to vector<8x512xbf16>
    %c0_12 = arith.constant 0 : index
    %c0_13 = arith.constant 0 : index
    %18 = vector.load %arg6[%c0_12, %c0_13] : memref<512x256xbf16, #tpu.memory_space<vmem>>, vector<512x256xbf16>
    %cst_14 = arith.constant dense<0.000000e+00> : vector<8x256xf32>
    %19 = tpu.matmul %17, %18, %cst_14 {dimension_numbers = #tpu.dot_dimension_numbers<[1], [0], [0], [1], [0, 0, 1, 1], [], []>} : vector<8x512xbf16>, vector<512x256xbf16>, vector<8x256xf32> -> vector<8x256xf32>
    %c0_15 = arith.constant 0 : index
    %c0_16 = arith.constant 0 : index
    %20 = vector.load %arg7[%c0_15, %c0_16] : memref<1x256xf32, #tpu.memory_space<vmem>>, vector<1x256xf32>
    %21 = vector.broadcast %20 : vector<1x256xf32> to vector<8x256xf32>
    %22 = arith.addf %19, %21 : vector<8x256xf32>
    %cst_17 = arith.constant 0.000000e+00 : f32
    %23 = vector.broadcast %cst_17 : f32 to vector<8x256xf32>
    %24 = arith.maximumf %22, %23 : vector<8x256xf32>
    %25 = arith.truncf %24 : vector<8x256xf32> to vector<8x256xbf16>
    %c0_18 = arith.constant 0 : index
    %c0_19 = arith.constant 0 : index
    %26 = vector.load %arg8[%c0_18, %c0_19] : memref<256x128xbf16, #tpu.memory_space<vmem>>, vector<256x128xbf16>
    %cst_20 = arith.constant dense<0.000000e+00> : vector<8x128xf32>
    %27 = tpu.matmul %25, %26, %cst_20 {dimension_numbers = #tpu.dot_dimension_numbers<[1], [0], [0], [1], [0, 0, 1, 1], [], []>} : vector<8x256xbf16>, vector<256x128xbf16>, vector<8x128xf32> -> vector<8x128xf32>
    %c0_21 = arith.constant 0 : index
    %c0_22 = arith.constant 0 : index
    %28 = vector.load %arg9[%c0_21, %c0_22] : memref<1x128xf32, #tpu.memory_space<vmem>>, vector<1x128xf32>
    %29 = vector.broadcast %28 : vector<1x128xf32> to vector<8x128xf32>
    %30 = arith.addf %27, %29 : vector<8x128xf32>
    %c0_23 = arith.constant 0 : index
    %c0_24 = arith.constant 0 : index
    %31 = vector.load %arg10[%c0_23, %c0_24] : memref<8x128xf32, #tpu.memory_space<vmem>>, vector<8x128xf32>
    tpu.vector_store %arg10[%c0_23, %c0_24], %30 {strides = array<i32>} : memref<8x128xf32, #tpu.memory_space<vmem>>, vector<8x128xf32>,
    return
  }
  func.func @transform_0(%arg0: i32) -> (i32, i32) {
    %c0_i32 = arith.constant 0 : i32
    %c0_i32_0 = arith.constant 0 : i32
    return %arg0, %c0_i32 : i32, i32
  }
  func.func @transform_1(%arg0: i32) -> (i32, i32) {
    %c0_i32 = arith.constant 0 : i32
    %c0_i32_0 = arith.constant 0 : i32
    %c0_i32_1 = arith.constant 0 : i32
    return %c0_i32, %c0_i32_0 : i32, i32
  }
  func.func @transform_2(%arg0: i32) -> (i32, i32) {
    %c0_i32 = arith.constant 0 : i32
    %c0_i32_0 = arith.constant 0 : i32
    %c0_i32_1 = arith.constant 0 : i32
    return %c0_i32, %c0_i32_0 : i32, i32
  }
  func.func @transform_3(%arg0: i32) -> (i32, i32) {
    %c0_i32 = arith.constant 0 : i32
    %c0_i32_0 = arith.constant 0 : i32
    %c0_i32_1 = arith.constant 0 : i32
    return %c0_i32, %c0_i32_0 : i32, i32
  }
  func.func @transform_4(%arg0: i32) -> (i32, i32) {
    %c0_i32 = arith.constant 0 : i32
    %c0_i32_0 = arith.constant 0 : i32
    %c0_i32_1 = arith.constant 0 : i32
    return %c0_i32, %c0_i32_0 : i32, i32
  }
  func.func @transform_5(%arg0: i32) -> (i32, i32) {
    %c0_i32 = arith.constant 0 : i32
    %c0_i32_0 = arith.constant 0 : i32
    %c0_i32_1 = arith.constant 0 : i32
    return %c0_i32, %c0_i32_0 : i32, i32
  }
  func.func @transform_6(%arg0: i32) -> (i32, i32) {
    %c0_i32 = arith.constant 0 : i32
    %c0_i32_0 = arith.constant 0 : i32
    %c0_i32_1 = arith.constant 0 : i32
    return %c0_i32, %c0_i32_0 : i32, i32
  }
  func.func @transform_7(%arg0: i32) -> (i32, i32) {
    %c0_i32 = arith.constant 0 : i32
    %c0_i32_0 = arith.constant 0 : i32
    %c0_i32_1 = arith.constant 0 : i32
    return %c0_i32, %c0_i32_0 : i32, i32
  }
  func.func @transform_8(%arg0: i32) -> (i32, i32) {
    %c0_i32 = arith.constant 0 : i32
    %c0_i32_0 = arith.constant 0 : i32
    %c0_i32_1 = arith.constant 0 : i32
    return %c0_i32, %c0_i32_0 : i32, i32
  }
  func.func @transform_9(%arg0: i32) -> (i32, i32) {
    %c0_i32 = arith.constant 0 : i32
    %c0_i32_0 = arith.constant 0 : i32
    return %arg0, %c0_i32 : i32, i32
  }
}

</mosaic_0001>

<llo_original>
// kernel: tpu_custom_call.1
$region0: #{tpu_custom_call.1}
  #allocation0 [shape = 'u32[]', space=smem, size = 0x4, offset = 0x4, fixed_abs, tag = 'smem constant byte address 0x4 - core index']
  #allocation1 [shape = 'u32[72,128]{1,0:T(1,128)}', space=vmem, size = 0x9000, scoped, tag = 'internal scratch']
  %s0 = inlined_call_operand.hbm [shape: f32[8,49], index: 0, kind: input, shape index: {}]
  %s1 = inlined_call_operand.hbm [shape: bf16[49,256], index: 1, kind: input, shape index: {}]
  %s2 = inlined_call_operand.hbm [shape: f32[1,256], index: 2, kind: input, shape index: {}]
  %s3 = inlined_call_operand.hbm [shape: bf16[256,512], index: 3, kind: input, shape index: {}]
  %s4 = inlined_call_operand.hbm [shape: f32[1,512], index: 4, kind: input, shape index: {}]
  %s5 = inlined_call_operand.hbm [shape: bf16[512,256], index: 5, kind: input, shape index: {}]
  %s6 = inlined_call_operand.vmem [shape: f32[1,256], index: 6, kind: input, shape index: {}]
  %s7 = inlined_call_operand.hbm [shape: bf16[256,128], index: 7, kind: input, shape index: {}]
  %s8 = inlined_call_operand.vmem [shape: f32[1,128], index: 8, kind: input, shape index: {}]
  %s9 = inlined_call_operand.hbm [shape: f32[8,128], index: 9, kind: output, shape index: {}]
  %s10 = sld [smem:[#allocation0]]
  $region74: #{tpu_custom_call.1} parent=0
    _
  %s12 = ssub.s32 1, %s10
  %s13 = scalar_select 0, %s12, %s10
  $region1: #{tpu_custom_call.1} parent=0
    #allocation2 [shape = 'u8[4096]{0}', space=vmem, size = 0x1000, scoped, tag = 'input window, operand 0, single buffered']
    #allocation3 [shape = 's32[1]{0}', space=sflag, size = 0x4, scoped, tag = 'scoped memory for tpu_custom_call.1']
    #allocation4 [shape = 's32[1]{0}', space=sflag, size = 0x4, scoped, tag = 'scoped memory for tpu_custom_call.1']
    #allocation5 [shape = 'u8[28672]{0}', space=vmem, size = 0x7000, scoped, tag = 'input window, operand 1, single buffered']
    #allocation6 [shape = 's32[1]{0}', space=sflag, size = 0x4, scoped, tag = 'scoped memory for tpu_custom_call.1']
    #allocation7 [shape = 'u8[1024]{0}', space=vmem, size = 0x400, scoped, tag = 'input window, operand 2, single buffered']
    #allocation8 [shape = 'u8[262144]{0}', space=vmem, size = 0x40000, scoped, tag = 'input window, operand 3, single buffered']
    #allocation9 [shape = 's32[1]{0}', space=sflag, size = 0x4, scoped, tag = 'scoped memory for tpu_custom_call.1']
    #allocation10 [shape = 'u8[2048]{0}', space=vmem, size = 0x800, scoped, tag = 'input window, operand 4, single buffered']
    #allocation11 [shape = 'u8[262144]{0}', space=vmem, size = 0x40000, scoped, tag = 'input window, operand 5, single buffered']
    #allocation12 [shape = 's32[1]{0}', space=sflag, size = 0x4, scoped, tag = 'scoped memory for tpu_custom_call.1']
    #allocation13 [shape = 'u8[65536]{0}', space=vmem, size = 0x10000, scoped, tag = 'input window, operand 7, single buffered']
    #allocation14 [shape = 'u8[4096]{0}', space=vmem, size = 0x1000, scoped, tag = 'output window, operand 0, single buffered']
    %14 = vsyncpa [#allocation3], 0
    %15 = vsyncpa [#allocation6], 0
    %16 = vsyncpa [#allocation9], 0
    %17 = vsyncpa [#allocation12], 0
    %18 = vsyncpa [#allocation4], 0
    // Predicated region
    $region2: #{tpu_custom_call.1} parent=1 // pred_check
      _
    $region3: #{tpu_custom_call.1} parent=1 // pred_check_branch
      %20 = sbr.rel (0) target = $region5
    $region4: #{tpu_custom_call.1} parent=1 // pred_region
      %22 = vsyncadd [#allocation3], 0
      %s24 = sshll.u32 %s0, 4
      %s25 = int_to_ptr.hbm [resolvable:$true] %s24
      %s26 = sshll.u32 [#allocation2], 4
      %s27 = int_to_ptr.vmem [resolvable:$true] %s26
      %29 = dma.hbm_to_vmem [thread:$0]  %s25, 128, %s27, [#allocation3]
    $region5: #{tpu_custom_call.1} parent=1 // pred_fallthru
      _
    // Predicated region
    $region6: #{tpu_custom_call.1} parent=1 // pred_check
      _
    $region7: #{tpu_custom_call.1} parent=1 // pred_check_branch
      %31 = sbr.rel (0) target = $region9
    $region8: #{tpu_custom_call.1} parent=1 // pred_region
      %33 = vsyncadd [#allocation6], 0
      %s34 = sshll.u32 %s1, 4
      %s35 = int_to_ptr.hbm [resolvable:$true] %s34
      %s36 = sshll.u32 [#allocation5], 4
      %s37 = int_to_ptr.vmem [resolvable:$true] %s36
      %42 = dma.hbm_to_vmem [thread:$0]  %s35, 896, %s37, [#allocation6], 128, 128, 8
    $region9: #{tpu_custom_call.1} parent=1 // pred_fallthru
      _
    // Predicated region
    $region10: #{tpu_custom_call.1} parent=1 // pred_check
      _
    $region11: #{tpu_custom_call.1} parent=1 // pred_check_branch
      %44 = sbr.rel (0) target = $region13
    $region12: #{tpu_custom_call.1} parent=1 // pred_region
      %46 = vsyncadd [#allocation6], 0
      %s48 = sshll.u32 %s2, 4
      %s49 = int_to_ptr.hbm [resolvable:$true] %s48
      %s50 = sshll.u32 [#allocation7], 4
      %s51 = int_to_ptr.vmem [resolvable:$true] %s50
      %53 = dma.hbm_to_vmem [thread:$0]  %s49, 32, %s51, [#allocation6]
    $region13: #{tpu_custom_call.1} parent=1 // pred_fallthru
      _
    // Predicated region
    $region14: #{tpu_custom_call.1} parent=1 // pred_check
      _
    $region15: #{tpu_custom_call.1} parent=1 // pred_check_branch
      %55 = sbr.rel (0) target = $region17
    $region16: #{tpu_custom_call.1} parent=1 // pred_region
      %57 = vsyncadd [#allocation9], 0
      %s58 = sshll.u32 %s3, 4
      %s59 = int_to_ptr.hbm [resolvable:$true] %s58
      %s60 = sshll.u32 [#allocation8], 4
      %s61 = int_to_ptr.vmem [resolvable:$true] %s60
      %66 = dma.hbm_to_vmem [thread:$0]  %s59, 8192, %s61, [#allocation9], 256, 256, 16
    $region17: #{tpu_custom_call.1} parent=1 // pred_fallthru
      _
    // Predicated region
    $region18: #{tpu_custom_call.1} parent=1 // pred_check
      _
    $region19: #{tpu_custom_call.1} parent=1 // pred_check_branch
      %68 = sbr.rel (0) target = $region21
    $region20: #{tpu_custom_call.1} parent=1 // pred_region
      %70 = vsyncadd [#allocation9], 0
      %s72 = sshll.u32 %s4, 4
      %s73 = int_to_ptr.hbm [resolvable:$true] %s72
      %s74 = sshll.u32 [#allocation10], 4
      %s75 = int_to_ptr.vmem [resolvable:$true] %s74
      %77 = dma.hbm_to_vmem [thread:$0]  %s73, 64, %s75, [#allocation9]
    $region21: #{tpu_custom_call.1} parent=1 // pred_fallthru
      _
    // Predicated region
    $region22: #{tpu_custom_call.1} parent=1 // pred_check
      _
    $region23: #{tpu_custom_call.1} parent=1 // pred_check_branch
      %79 = sbr.rel (0) target = $region25
    $region24: #{tpu_custom_call.1} parent=1 // pred_region
      %81 = vsyncadd [#allocation12], 0
      %s82 = sshll.u32 %s5, 4
      %s83 = int_to_ptr.hbm [resolvable:$true] %s82
      %s84 = sshll.u32 [#allocation11], 4
      %s85 = int_to_ptr.vmem [resolvable:$true] %s84
      %90 = dma.hbm_to_vmem [thread:$0]  %s83, 8192, %s85, [#allocation12], 128, 128, 8
    $region25: #{tpu_custom_call.1} parent=1 // pred_fallthru
      _
    // Predicated region
    $region26: #{tpu_custom_call.1} parent=1 // pred_check
      _
    $region27: #{tpu_custom_call.1} parent=1 // pred_check_branch
      %92 = sbr.rel (0) target = $region29
    $region28: #{tpu_custom_call.1} parent=1 // pred_region
      _
    $region29: #{tpu_custom_call.1} parent=1 // pred_fallthru
      _
    // Predicated region
    $region30: #{tpu_custom_call.1} parent=1 // pred_check
      _
    $region31: #{tpu_custom_call.1} parent=1 // pred_check_branch
      %94 = sbr.rel (0) target = $region33
    $region32: #{tpu_custom_call.1} parent=1 // pred_region
      %96 = vsyncadd [#allocation12], 0
      %s97 = sshll.u32 %s7, 4
      %s98 = int_to_ptr.hbm [resolvable:$true] %s97
      %s99 = sshll.u32 [#allocation13], 4
      %s100 = int_to_ptr.vmem [resolvable:$true] %s99
      %105 = dma.hbm_to_vmem [thread:$0]  %s98, 2048, %s100, [#allocation12], 64, 64, 4
    $region33: #{tpu_custom_call.1} parent=1 // pred_fallthru
      _
    // Predicated region
    $region34: #{tpu_custom_call.1} parent=1 // pred_check
      _
    $region35: #{tpu_custom_call.1} parent=1 // pred_check_branch
      %107 = sbr.rel (0) target = $region37
    $region36: #{tpu_custom_call.1} parent=1 // pred_region
      _
    $region37: #{tpu_custom_call.1} parent=1 // pred_fallthru
      _
    // Predicated region
    $region38: #{tpu_custom_call.1} parent=1 // pred_check
      _
    $region39: #{tpu_custom_call.1} parent=1 // pred_check_branch
      %109 = sbr.rel (0) target = $region41
    $region40: #{tpu_custom_call.1} parent=1 // pred_region
      %111 = dma.done [#allocation3], 128
    $region41: #{tpu_custom_call.1} parent=1 // pred_fallthru
      _
    // Predicated region
    $region42: #{tpu_custom_call.1} parent=1 // pred_check
      _
    $region43: #{tpu_custom_call.1} parent=1 // pred_check_branch
      %113 = sbr.rel (0) target = $region45
    $region44: #{tpu_custom_call.1} parent=1 // pred_region
      %115 = dma.done [#allocation6], 896
    $region45: #{tpu_custom_call.1} parent=1 // pred_fallthru
      _
    // Predicated region
    $region46: #{tpu_custom_call.1} parent=1 // pred_check
      _
    $region47: #{tpu_custom_call.1} parent=1 // pred_check_branch
      %117 = sbr.rel (0) target = $region49
    $region48: #{tpu_custom_call.1} parent=1 // pred_region
      %119 = dma.done [#allocation6], 32
    $region49: #{tpu_custom_call.1} parent=1 // pred_fallthru
      _
    // Predicated region
    $region50: #{tpu_custom_call.1} parent=1 // pred_check
      _
    $region51: #{tpu_custom_call.1} parent=1 // pred_check_branch
      %121 = sbr.rel (0) target = $region53
    $region52: #{tpu_custom_call.1} parent=1 // pred_region
      %123 = dma.done [#allocation9], 8192
    $region53: #{tpu_custom_call.1} parent=1 // pred_fallthru
      _
    // Predicated region
    $region54: #{tpu_custom_call.1} parent=1 // pred_check
      _
    $region55: #{tpu_custom_call.1} parent=1 // pred_check_branch
      %125 = sbr.rel (0) target = $region57
    $region56: #{tpu_custom_call.1} parent=1 // pred_region
      %127 = dma.done [#allocation9], 64
    $region57: #{tpu_custom_call.1} parent=1 // pred_fallthru
      _
    // Predicated region
    $region58: #{tpu_custom_call.1} parent=1 // pred_check
      _
    $region59: #{tpu_custom_call.1} parent=1 // pred_check_branch
      %129 = sbr.rel (0) target = $region61
    $region60: #{tpu_custom_call.1} parent=1 // pred_region
      %131 = dma.done [#allocation12], 8192
    $region61: #{tpu_custom_call.1} parent=1 // pred_fallthru
      _
    // Predicated region
    $region62: #{tpu_custom_call.1} parent=1 // pred_check
      _
    $region63: #{tpu_custom_call.1} parent=1 // pred_check_branch
      %133 = sbr.rel (0) target = $region65
    $region64: #{tpu_custom_call.1} parent=1 // pred_region
      %135 = dma.done [#allocation12], 2048
    $region65: #{tpu_custom_call.1} parent=1 // pred_fallthru
      _
    %v137 = vld [vmem:[#allocation2] sm:$0xff]
    %v138 = vpack.c.bf16 %v137, %v137
    %v139 = vld [vmem:[#allocation5] sm:$0xff]
    %v140 = vld [vmem:[#allocation5 + $0x8] sm:$0xff]
    %v141 = vld [vmem:[#allocation5 + $0x10] sm:$0xff]
    %v142 = vld [vmem:[#allocation5 + $0x18] sm:$0xff]
    %v143 = vld [vmem:[#allocation5 + $0x20] sm:$0xff]
    %v144 = vld [vmem:[#allocation5 + $0x28] sm:$0xff]
    %v145 = vld [vmem:[#allocation5 + $0x30] sm:$0x11]
    %v146 = vld [vmem:[#allocation7] sm:$0x3]
    %v148 = vperm.slane %v146, 0
    %v149 = vperm.slane %v146, 1
    %v159 = vunpack.c.l.b16 %v139
    %v160 = vunpack.c.h.b16 %v139
    %v161 = vunpack.c.l.b16 %v140
    %v162 = vunpack.c.h.b16 %v140
    %v163 = vunpack.c.l.b16 %v141
    %v164 = vunpack.c.h.b16 %v141
    %v165 = vunpack.c.l.b16 %v142
    %v166 = vunpack.c.h.b16 %v142
    %v167 = vunpack.c.l.b16 %v143
    %v168 = vunpack.c.h.b16 %v143
    %v169 = vunpack.c.l.b16 %v144
    %v170 = vunpack.c.h.b16 %v144
    %v171 = vunpack.c.l.b16 %v145
    %v172 = vunpack.c.h.b16 %v145
    %v173 = vpack.c.b16 %v161, %v159
    %v174 = vpack.c.b16 %v162, %v160
    %v175 = vpack.c.b16 %v165, %v163
    %v176 = vpack.c.b16 %v166, %v164
    %v177 = vpack.c.b16 %v169, %v167
    %v178 = vpack.c.b16 %v170, %v168
    %v179 = vpack.c.b16 %v171, %v171
    %v180 = vpack.c.b16 %v172, %v172
    %vm187 = vcmask 400384
    %v189 = vsel %vm187, %v138, 0
    %vm191 = vcmask 1040384
    %v192 = vsel 0, 4294967295, 65535
    %v193 = vsel %vm191, %v192, 0
    %v195 = vand.u32 %v179, %v193
    %v198 = vand.u32 %v180, %v193
    %200 = vmatpush.bf16.msra.mxu0 0
    %201 = vmatpush.bf16.msra.mxu0 0
    %202 = vmatpush.bf16.msra.mxu0 0
    %203 = vmatpush.bf16.msra.mxu0 0
    %204 = vmatpush.bf16.msra.mxu0 %v195
    %205 = vmatpush.bf16.msra.mxu0 %v177
    %206 = vmatpush.bf16.msra.mxu0 %v175
    %207 = vmatpush.bf16.msra.mxu0 %v173
    %208 = vmatmul.bf16.gmra.mxu0 %v189
    %v209 = vpop.f32.mrf.mxu0
    %v210 = vadd.f32 %v148, %v209
    %v211 = vpop.f32.mrf.mxu0
    %212 = vdwg.mxu0
    %213 = vmatpush.bf16.msra.mxu0 0
    %214 = vmatpush.bf16.msra.mxu0 0
    %215 = vmatpush.bf16.msra.mxu0 0
    %216 = vmatpush.bf16.msra.mxu0 0
    %217 = vmatpush.bf16.msra.mxu0 %v198
    %218 = vmatpush.bf16.msra.mxu0 %v178
    %219 = vmatpush.bf16.msra.mxu0 %v176
    %220 = vmatpush.bf16.msra.mxu0 %v174
    %221 = vmatmul.bf16.gmra.mxu0 %v189
    %v222 = vpop.f32.mrf.mxu0
    %v223 = vadd.f32 %v149, %v222
    %v224 = vpop.f32.mrf.mxu0
    %225 = vdwg.mxu0
    %v226 = vmax.f32 %v210, 0.0
    %v227 = vmax.f32 %v223, 0.0
    %v228 = vpack.c.bf16 %v226, %v226
    %v229 = vpack.c.bf16 %v227, %v227
    %v230 = vld [vmem:[#allocation8] sm:$0xff]
    %v231 = vld [vmem:[#allocation8 + $0x8] sm:$0xff]
    %v232 = vld [vmem:[#allocation8 + $0x10] sm:$0xff]
    %v233 = vld [vmem:[#allocation8 + $0x18] sm:$0xff]
    %v234 = vld [vmem:[#allocation8 + $0x20] sm:$0xff]
    %v235 = vld [vmem:[#allocation8 + $0x28] sm:$0xff]
    %v236 = vld [vmem:[#allocation8 + $0x30] sm:$0xff]
    %v237 = vld [vmem:[#allocation8 + $0x38] sm:$0xff]
    %v238 = vld [vmem:[#allocation8 + $0x40] sm:$0xff]
    %v239 = vld [vmem:[#allocation8 + $0x48] sm:$0xff]
    %v240 = vld [vmem:[#allocation8 + $0x50] sm:$0xff]
    %v241 = vld [vmem:[#allocation8 + $0x58] sm:$0xff]
    %v242 = vld [vmem:[#allocation8 + $0x60] sm:$0xff]
    %v243 = vld [vmem:[#allocation8 + $0x68] sm:$0xff]
    %v244 = vld [vmem:[#allocation8 + $0x70] sm:$0xff]
    %v245 = vld [vmem:[#allocation8 + $0x78] sm:$0xff]
    %v246 = vld [vmem:[#allocation8 + $0x80] sm:$0xff]
    %v247 = vld [vmem:[#allocation8 + $0x88] sm:$0xff]
    %v248 = vld [vmem:[#allocation8 + $0x90] sm:$0xff]
    %v249 = vld [vmem:[#allocation8 + $0x98] sm:$0xff]
    %v250 = vld [vmem:[#allocation8 + $0xa0] sm:$0xff]
    %v251 = vld [vmem:[#allocation8 + $0xa8] sm:$0xff]
    %v252 = vld [vmem:[#allocation8 + $0xb0] sm:$0xff]
    %v253 = vld [vmem:[#allocation8 + $0xb8] sm:$0xff]
    %v254 = vld [vmem:[#allocation8 + $0xc0] sm:$0xff]
    %v255 = vld [vmem:[#allocation8 + $0xc8] sm:$0xff]
    %v256 = vld [vmem:[#allocation8 + $0xd0] sm:$0xff]
    %v257 = vld [vmem:[#allocation8 + $0xd8] sm:$0xff]
    %v258 = vld [vmem:[#allocation8 + $0xe0] sm:$0xff]
    %v259 = vld [vmem:[#allocation8 + $0xe8] sm:$0xff]
    %v260 = vld [vmem:[#allocation8 + $0xf0] sm:$0xff]
    %v261 = vld [vmem:[#allocation8 + $0xf8] sm:$0xff]
    %v262 = vld [vmem:[#allocation8 + $0x100] sm:$0xff]
    %v263 = vld [vmem:[#allocation8 + $0x108] sm:$0xff]
    %v264 = vld [vmem:[#allocation8 + $0x110] sm:$0xff]
    %v265 = vld [vmem:[#allocation8 + $0x118] sm:$0xff]
    %v266 = vld [vmem:[#allocation8 + $0x120] sm:$0xff]
    %v267 = vld [vmem:[#allocation8 + $0x128] sm:$0xff]
    %v268 = vld [vmem:[#allocation8 + $0x130] sm:$0xff]
    %v269 = vld [vmem:[#allocation8 + $0x138] sm:$0xff]
    %v270 = vld [vmem:[#allocation8 + $0x140] sm:$0xff]
    %v271 = vld [vmem:[#allocation8 + $0x148] sm:$0xff]
    %v272 = vld [vmem:[#allocation8 + $0x150] sm:$0xff]
    %v273 = vld [vmem:[#allocation8 + $0x158] sm:$0xff]
    %v274 = vld [vmem:[#allocation8 + $0x160] sm:$0xff]
    %v275 = vld [vmem:[#allocation8 + $0x168] sm:$0xff]
    %v276 = vld [vmem:[#allocation8 + $0x170] sm:$0xff]
    %v277 = vld [vmem:[#allocation8 + $0x178] sm:$0xff]
    %v278 = vld [vmem:[#allocation8 + $0x180] sm:$0xff]
    %v279 = vld [vmem:[#allocation8 + $0x188] sm:$0xff]
    %v280 = vld [vmem:[#allocation8 + $0x190] sm:$0xff]
    %v281 = vld [vmem:[#allocation8 + $0x198] sm:$0xff]
    %v282 = vld [vmem:[#allocation8 + $0x1a0] sm:$0xff]
    %v283 = vld [vmem:[#allocation8 + $0x1a8] sm:$0xff]
    %v284 = vld [vmem:[#allocation8 + $0x1b0] sm:$0xff]
    %v285 = vld [vmem:[#allocation8 + $0x1b8] sm:$0xff]
    %v286 = vld [vmem:[#allocation8 + $0x1c0] sm:$0xff]
    %v287 = vld [vmem:[#allocation8 + $0x1c8] sm:$0xff]
    %v288 = vld [vmem:[#allocation8 + $0x1d0] sm:$0xff]
    %v289 = vld [vmem:[#allocation8 + $0x1d8] sm:$0xff]
    %v290 = vld [vmem:[#allocation8 + $0x1e0] sm:$0xff]
    %v291 = vld [vmem:[#allocation8 + $0x1e8] sm:$0xff]
    %v292 = vld [vmem:[#allocation8 + $0x1f0] sm:$0xff]
    %v293 = vld [vmem:[#allocation8 + $0x1f8] sm:$0xff]
    %v294 = vld [vmem:[#allocation10] sm:$0xf]
    %v296 = vperm.slane %v294, 0
    %v297 = vperm.slane %v294, 1
    %v298 = vperm.slane %v294, 2
    %v299 = vperm.slane %v294, 3
    %v368 = vunpack.c.l.b16 %v230
    %v369 = vunpack.c.h.b16 %v230
    %v370 = vunpack.c.l.b16 %v231
    %v371 = vunpack.c.h.b16 %v231
    %v372 = vunpack.c.l.b16 %v232
    %v373 = vunpack.c.h.b16 %v232
    %v374 = vunpack.c.l.b16 %v233
    %v375 = vunpack.c.h.b16 %v233
    %v376 = vunpack.c.l.b16 %v234
    %v377 = vunpack.c.h.b16 %v234
    %v378 = vunpack.c.l.b16 %v235
    %v379 = vunpack.c.h.b16 %v235
    %v380 = vunpack.c.l.b16 %v236
    %v381 = vunpack.c.h.b16 %v236
    %v382 = vunpack.c.l.b16 %v237
    %v383 = vunpack.c.h.b16 %v237
    %v384 = vunpack.c.l.b16 %v238
    %v385 = vunpack.c.h.b16 %v238
    %v386 = vunpack.c.l.b16 %v239
    %v387 = vunpack.c.h.b16 %v239
    %v388 = vunpack.c.l.b16 %v240
    %v389 = vunpack.c.h.b16 %v240
    %v390 = vunpack.c.l.b16 %v241
    %v391 = vunpack.c.h.b16 %v241
    %v392 = vunpack.c.l.b16 %v242
    %v393 = vunpack.c.h.b16 %v242
    %v394 = vunpack.c.l.b16 %v243
    %v395 = vunpack.c.h.b16 %v243
    %v396 = vunpack.c.l.b16 %v244
    %v397 = vunpack.c.h.b16 %v244
    %v398 = vunpack.c.l.b16 %v245
    %v399 = vunpack.c.h.b16 %v245
    %v400 = vunpack.c.l.b16 %v246
    %v401 = vunpack.c.h.b16 %v246
    %v402 = vunpack.c.l.b16 %v247
    %v403 = vunpack.c.h.b16 %v247
    %v404 = vunpack.c.l.b16 %v248
    %v405 = vunpack.c.h.b16 %v248
    %v406 = vunpack.c.l.b16 %v249
    %v407 = vunpack.c.h.b16 %v249
    %v408 = vunpack.c.l.b16 %v250
    %v409 = vunpack.c.h.b16 %v250
    %v410 = vunpack.c.l.b16 %v251
    %v411 = vunpack.c.h.b16 %v251
    %v412 = vunpack.c.l.b16 %v252
    %v413 = vunpack.c.h.b16 %v252
    %v414 = vunpack.c.l.b16 %v253
    %v415 = vunpack.c.h.b16 %v253
    %v416 = vunpack.c.l.b16 %v254
    %v417 = vunpack.c.h.b16 %v254
    %v418 = vunpack.c.l.b16 %v255
    %v419 = vunpack.c.h.b16 %v255
    %v420 = vunpack.c.l.b16 %v256
    %v421 = vunpack.c.h.b16 %v256
    %v422 = vunpack.c.l.b16 %v257
    %v423 = vunpack.c.h.b16 %v257
    %v424 = vunpack.c.l.b16 %v258
    %v425 = vunpack.c.h.b16 %v258
    %v426 = vunpack.c.l.b16 %v259
    %v427 = vunpack.c.h.b16 %v259
    %v428 = vunpack.c.l.b16 %v260
    %v429 = vunpack.c.h.b16 %v260
    %v430 = vunpack.c.l.b16 %v261
    %v431 = vunpack.c.h.b16 %v261
    %v432 = vunpack.c.l.b16 %v262
    %v433 = vunpack.c.h.b16 %v262
    %v434 = vunpack.c.l.b16 %v263
    %v435 = vunpack.c.h.b16 %v263
    %v436 = vunpack.c.l.b16 %v264
    %v437 = vunpack.c.h.b16 %v264
    %v438 = vunpack.c.l.b16 %v265
    %v439 = vunpack.c.h.b16 %v265
    %v440 = vunpack.c.l.b16 %v266
    %v441 = vunpack.c.h.b16 %v266
    %v442 = vunpack.c.l.b16 %v267
    %v443 = vunpack.c.h.b16 %v267
    %v444 = vunpack.c.l.b16 %v268
    %v445 = vunpack.c.h.b16 %v268
    %v446 = vunpack.c.l.b16 %v269
    %v447 = vunpack.c.h.b16 %v269
    %v448 = vunpack.c.l.b16 %v270
    %v449 = vunpack.c.h.b16 %v270
    %v450 = vunpack.c.l.b16 %v271
    %v451 = vunpack.c.h.b16 %v271
    %v452 = vunpack.c.l.b16 %v272
    %v453 = vunpack.c.h.b16 %v272
    %v454 = vunpack.c.l.b16 %v273
    %v455 = vunpack.c.h.b16 %v273
    %v456 = vunpack.c.l.b16 %v274
    %v457 = vunpack.c.h.b16 %v274
    %v458 = vunpack.c.l.b16 %v275
    %v459 = vunpack.c.h.b16 %v275
    %v460 = vunpack.c.l.b16 %v276
    %v461 = vunpack.c.h.b16 %v276
    %v462 = vunpack.c.l.b16 %v277
    %v463 = vunpack.c.h.b16 %v277
    %v464 = vunpack.c.l.b16 %v278
    %v465 = vunpack.c.h.b16 %v278
    %v466 = vunpack.c.l.b16 %v279
    %v467 = vunpack.c.h.b16 %v279
    %v468 = vunpack.c.l.b16 %v280
    %v469 = vunpack.c.h.b16 %v280
    %v470 = vunpack.c.l.b16 %v281
    %v471 = vunpack.c.h.b16 %v281
    %v472 = vunpack.c.l.b16 %v282
    %v473 = vunpack.c.h.b16 %v282
    %v474 = vunpack.c.l.b16 %v283
    %v475 = vunpack.c.h.b16 %v283
    %v476 = vunpack.c.l.b16 %v284
    %v477 = vunpack.c.h.b16 %v284
    %v478 = vunpack.c.l.b16 %v285
    %v479 = vunpack.c.h.b16 %v285
    %v480 = vunpack.c.l.b16 %v286
    %v481 = vunpack.c.h.b16 %v286
    %v482 = vunpack.c.l.b16 %v287
    %v483 = vunpack.c.h.b16 %v287
    %v484 = vunpack.c.l.b16 %v288
    %v485 = vunpack.c.h.b16 %v288
    %v486 = vunpack.c.l.b16 %v289
    %v487 = vunpack.c.h.b16 %v289
    %v488 = vunpack.c.l.b16 %v290
    %v489 = vunpack.c.h.b16 %v290
    %v490 = vunpack.c.l.b16 %v291
    %v491 = vunpack.c.h.b16 %v291
    %v492 = vunpack.c.l.b16 %v292
    %v493 = vunpack.c.h.b16 %v292
    %v494 = vunpack.c.l.b16 %v293
    %v495 = vunpack.c.h.b16 %v293
    %v496 = vpack.c.b16 %v372, %v368
    %v497 = vpack.c.b16 %v373, %v369
    %v498 = vpack.c.b16 %v374, %v370
    %v499 = vpack.c.b16 %v375, %v371
    %v500 = vpack.c.b16 %v380, %v376
    %v501 = vpack.c.b16 %v381, %v377
    %v502 = vpack.c.b16 %v382, %v378
    %v503 = vpack.c.b16 %v383, %v379
    %v504 = vpack.c.b16 %v388, %v384
    %v505 = vpack.c.b16 %v389, %v385
    %v506 = vpack.c.b16 %v390, %v386
    %v507 = vpack.c.b16 %v391, %v387
    %v508 = vpack.c.b16 %v396, %v392
    %v509 = vpack.c.b16 %v397, %v393
    %v510 = vpack.c.b16 %v398, %v394
    %v511 = vpack.c.b16 %v399, %v395
    %v512 = vpack.c.b16 %v404, %v400
    %v513 = vpack.c.b16 %v405, %v401
    %v514 = vpack.c.b16 %v406, %v402
    %v515 = vpack.c.b16 %v407, %v403
    %v516 = vpack.c.b16 %v412, %v408
    %v517 = vpack.c.b16 %v413, %v409
    %v518 = vpack.c.b16 %v414, %v410
    %v519 = vpack.c.b16 %v415, %v411
    %v520 = vpack.c.b16 %v420, %v416
    %v521 = vpack.c.b16 %v421, %v417
    %v522 = vpack.c.b16 %v422, %v418
    %v523 = vpack.c.b16 %v423, %v419
    %v524 = vpack.c.b16 %v428, %v424
    %v525 = vpack.c.b16 %v429, %v425
    %v526 = vpack.c.b16 %v430, %v426
    %v527 = vpack.c.b16 %v431, %v427
    %v528 = vpack.c.b16 %v436, %v432
    %v529 = vpack.c.b16 %v437, %v433
    %v530 = vpack.c.b16 %v438, %v434
    %v531 = vpack.c.b16 %v439, %v435
    %v532 = vpack.c.b16 %v444, %v440
    %v533 = vpack.c.b16 %v445, %v441
    %v534 = vpack.c.b16 %v446, %v442
    %v535 = vpack.c.b16 %v447, %v443
    %v536 = vpack.c.b16 %v452, %v448
    %v537 = vpack.c.b16 %v453, %v449
    %v538 = vpack.c.b16 %v454, %v450
    %v539 = vpack.c.b16 %v455, %v451
    %v540 = vpack.c.b16 %v460, %v456
    %v541 = vpack.c.b16 %v461, %v457
    %v542 = vpack.c.b16 %v462, %v458
    %v543 = vpack.c.b16 %v463, %v459
    %v544 = vpack.c.b16 %v468, %v464
    %v545 = vpack.c.b16 %v469, %v465
    %v546 = vpack.c.b16 %v470, %v466
    %v547 = vpack.c.b16 %v471, %v467
    %v548 = vpack.c.b16 %v476, %v472
    %v549 = vpack.c.b16 %v477, %v473
    %v550 = vpack.c.b16 %v478, %v474
    %v551 = vpack.c.b16 %v479, %v475
    %v552 = vpack.c.b16 %v484, %v480
    %v553 = vpack.c.b16 %v485, %v481
    %v554 = vpack.c.b16 %v486, %v482
    %v555 = vpack.c.b16 %v487, %v483
    %v556 = vpack.c.b16 %v492, %v488
    %v557 = vpack.c.b16 %v493, %v489
    %v558 = vpack.c.b16 %v494, %v490
    %v559 = vpack.c.b16 %v495, %v491
    %624 = vmatpush.bf16.msra.mxu0 %v524
    %625 = vmatpush.bf16.msra.mxu0 %v520
    %626 = vmatpush.bf16.msra.mxu0 %v516
    %627 = vmatpush.bf16.msra.mxu0 %v512
    %628 = vmatpush.bf16.msra.mxu0 %v508
    %629 = vmatpush.bf16.msra.mxu0 %v504
    %630 = vmatpush.bf16.msra.mxu0 %v500
    %631 = vmatpush.bf16.msra.mxu0 %v496
    %632 = vmatmul.bf16.gmra.mxu0 %v228
    %v633 = vpop.f32.mrf.mxu0
    %v634 = vadd.f32 %v296, %v633
    %v635 = vpop.f32.mrf.mxu0
    %636 = vdwg.mxu0
    %637 = vmatpush.bf16.msra.mxu0 %v556
    %638 = vmatpush.bf16.msra.mxu0 %v552
    %639 = vmatpush.bf16.msra.mxu0 %v548
    %640 = vmatpush.bf16.msra.mxu0 %v544
    %641 = vmatpush.bf16.msra.mxu0 %v540
    %642 = vmatpush.bf16.msra.mxu0 %v536
    %643 = vmatpush.bf16.msra.mxu0 %v532
    %644 = vmatpush.bf16.msra.mxu0 %v528
    %645 = vmatmul.bf16.gmra.mxu0 %v229
    %v646 = vpop.f32.mrf.mxu0
    %v647 = vadd.f32 %v634, %v646
    %v648 = vpop.f32.mrf.mxu0
    %649 = vdwg.mxu0
    %650 = vmatpush.bf16.msra.mxu0 %v525
    %651 = vmatpush.bf16.msra.mxu0 %v521
    %652 = vmatpush.bf16.msra.mxu0 %v517
    %653 = vmatpush.bf16.msra.mxu0 %v513
    %654 = vmatpush.bf16.msra.mxu0 %v509
    %655 = vmatpush.bf16.msra.mxu0 %v505
    %656 = vmatpush.bf16.msra.mxu0 %v501
    %657 = vmatpush.bf16.msra.mxu0 %v497
    %658 = vmatmul.bf16.gmra.mxu0 %v228
    %v659 = vpop.f32.mrf.mxu0
    %v660 = vadd.f32 %v297, %v659
    %v661 = vpop.f32.mrf.mxu0
    %662 = vdwg.mxu0
    %663 = vmatpush.bf16.msra.mxu0 %v557
    %664 = vmatpush.bf16.msra.mxu0 %v553
    %665 = vmatpush.bf16.msra.mxu0 %v549
    %666 = vmatpush.bf16.msra.mxu0 %v545
    %667 = vmatpush.bf16.msra.mxu0 %v541
    %668 = vmatpush.bf16.msra.mxu0 %v537
    %669 = vmatpush.bf16.msra.mxu0 %v533
    %670 = vmatpush.bf16.msra.mxu0 %v529
    %671 = vmatmul.bf16.gmra.mxu0 %v229
    %v672 = vpop.f32.mrf.mxu0
    %v673 = vadd.f32 %v660, %v672
    %v674 = vpop.f32.mrf.mxu0
    %675 = vdwg.mxu0
    %676 = vmatpush.bf16.msra.mxu0 %v526
    %677 = vmatpush.bf16.msra.mxu0 %v522
    %678 = vmatpush.bf16.msra.mxu0 %v518
    %679 = vmatpush.bf16.msra.mxu0 %v514
    %680 = vmatpush.bf16.msra.mxu0 %v510
    %681 = vmatpush.bf16.msra.mxu0 %v506
    %682 = vmatpush.bf16.msra.mxu0 %v502
    %683 = vmatpush.bf16.msra.mxu0 %v498
    %684 = vmatmul.bf16.gmra.mxu0 %v228
    %v685 = vpop.f32.mrf.mxu0
    %v686 = vadd.f32 %v298, %v685
    %v687 = vpop.f32.mrf.mxu0
    %688 = vdwg.mxu0
    %689 = vmatpush.bf16.msra.mxu0 %v558
    %690 = vmatpush.bf16.msra.mxu0 %v554
    %691 = vmatpush.bf16.msra.mxu0 %v550
    %692 = vmatpush.bf16.msra.mxu0 %v546
    %693 = vmatpush.bf16.msra.mxu0 %v542
    %694 = vmatpush.bf16.msra.mxu0 %v538
    %695 = vmatpush.bf16.msra.mxu0 %v534
    %696 = vmatpush.bf16.msra.mxu0 %v530
    %697 = vmatmul.bf16.gmra.mxu0 %v229
    %v698 = vpop.f32.mrf.mxu0
    %v699 = vadd.f32 %v686, %v698
    %v700 = vpop.f32.mrf.mxu0
    %701 = vdwg.mxu0
    %702 = vmatpush.bf16.msra.mxu0 %v527
    %703 = vmatpush.bf16.msra.mxu0 %v523
    %704 = vmatpush.bf16.msra.mxu0 %v519
    %705 = vmatpush.bf16.msra.mxu0 %v515
    %706 = vmatpush.bf16.msra.mxu0 %v511
    %707 = vmatpush.bf16.msra.mxu0 %v507
    %708 = vmatpush.bf16.msra.mxu0 %v503
    %709 = vmatpush.bf16.msra.mxu0 %v499
    %710 = vmatmul.bf16.gmra.mxu0 %v228
    %v711 = vpop.f32.mrf.mxu0
    %v712 = vadd.f32 %v299, %v711
    %v713 = vpop.f32.mrf.mxu0
    %714 = vdwg.mxu0
    %715 = vmatpush.bf16.msra.mxu0 %v559
    %716 = vmatpush.bf16.msra.mxu0 %v555
    %717 = vmatpush.bf16.msra.mxu0 %v551
    %718 = vmatpush.bf16.msra.mxu0 %v547
    %719 = vmatpush.bf16.msra.mxu0 %v543
    %720 = vmatpush.bf16.msra.mxu0 %v539
    %721 = vmatpush.bf16.msra.mxu0 %v535
    %722 = vmatpush.bf16.msra.mxu0 %v531
    %723 = vmatmul.bf16.gmra.mxu0 %v229
    %v724 = vpop.f32.mrf.mxu0
    %v725 = vadd.f32 %v712, %v724
    %v726 = vpop.f32.mrf.mxu0
    %727 = vdwg.mxu0
    %v728 = vmax.f32 %v647, 0.0
    %v729 = vmax.f32 %v673, 0.0
    %v730 = vmax.f32 %v699, 0.0
    %v731 = vmax.f32 %v725, 0.0
    %v732 = vpack.c.bf16 %v728, %v728
    %v733 = vpack.c.bf16 %v729, %v729
    %v734 = vpack.c.bf16 %v730, %v730
    %v735 = vpack.c.bf16 %v731, %v731
    %v736 = vld [vmem:[#allocation11] sm:$0xff]
    %v737 = vld [vmem:[#allocation11 + $0x8] sm:$0xff]
    %v738 = vld [vmem:[#allocation11 + $0x10] sm:$0xff]
    %v739 = vld [vmem:[#allocation11 + $0x18] sm:$0xff]
    %v740 = vld [vmem:[#allocation11 + $0x20] sm:$0xff]
    %v741 = vld [vmem:[#allocation11 + $0x28] sm:$0xff]
    %v742 = vld [vmem:[#allocation11 + $0x30] sm:$0xff]
    %v743 = vld [vmem:[#allocation11 + $0x38] sm:$0xff]
    %v744 = vld [vmem:[#allocation11 + $0x40] sm:$0xff]
    %v745 = vld [vmem:[#allocation11 + $0x48] sm:$0xff]
    %v746 = vld [vmem:[#allocation11 + $0x50] sm:$0xff]
    %v747 = vld [vmem:[#allocation11 + $0x58] sm:$0xff]
    %v748 = vld [vmem:[#allocation11 + $0x60] sm:$0xff]
    %v749 = vld [vmem:[#allocation11 + $0x68] sm:$0xff]
    %v750 = vld [vmem:[#allocation11 + $0x70] sm:$0xff]
    %v751 = vld [vmem:[#allocation11 + $0x78] sm:$0xff]
    %v752 = vld [vmem:[#allocation11 + $0x80] sm:$0xff]
    %v753 = vld [vmem:[#allocation11 + $0x88] sm:$0xff]
    %v754 = vld [vmem:[#allocation11 + $0x90] sm:$0xff]
    %v755 = vld [vmem:[#allocation11 + $0x98] sm:$0xff]
    %v756 = vld [vmem:[#allocation11 + $0xa0] sm:$0xff]
    %v757 = vld [vmem:[#allocation11 + $0xa8] sm:$0xff]
    %v758 = vld [vmem:[#allocation11 + $0xb0] sm:$0xff]
    %v759 = vld [vmem:[#allocation11 + $0xb8] sm:$0xff]
    %v760 = vld [vmem:[#allocation11 + $0xc0] sm:$0xff]
    %v761 = vld [vmem:[#allocation11 + $0xc8] sm:$0xff]
    %v762 = vld [vmem:[#allocation11 + $0xd0] sm:$0xff]
    %v763 = vld [vmem:[#allocation11 + $0xd8] sm:$0xff]
    %v764 = vld [vmem:[#allocation11 + $0xe0] sm:$0xff]
    %v765 = vld [vmem:[#allocation11 + $0xe8] sm:$0xff]
    %v766 = vld [vmem:[#allocation11 + $0xf0] sm:$0xff]
    %v767 = vld [vmem:[#allocation11 + $0xf8] sm:$0xff]
    %v768 = vld [vmem:[#allocation11 + $0x100] sm:$0xff]
    %v769 = vld [vmem:[#allocation11 + $0x108] sm:$0xff]
    %v770 = vld [vmem:[#allocation11 + $0x110] sm:$0xff]
    %v771 = vld [vmem:[#allocation11 + $0x118] sm:$0xff]
    %v772 = vld [vmem:[#allocation11 + $0x120] sm:$0xff]
    %v773 = vld [vmem:[#allocation11 + $0x128] sm:$0xff]
    %v774 = vld [vmem:[#allocation11 + $0x130] sm:$0xff]
    %v775 = vld [vmem:[#allocation11 + $0x138] sm:$0xff]
    %v776 = vld [vmem:[#allocation11 + $0x140] sm:$0xff]
    %v777 = vld [vmem:[#allocation11 + $0x148] sm:$0xff]
    %v778 = vld [vmem:[#allocation11 + $0x150] sm:$0xff]
    %v779 = vld [vmem:[#allocation11 + $0x158] sm:$0xff]
    %v780 = vld [vmem:[#allocation11 + $0x160] sm:$0xff]
    %v781 = vld [vmem:[#allocation11 + $0x168] sm:$0xff]
    %v782 = vld [vmem:[#allocation11 + $0x170] sm:$0xff]
    %v783 = vld [vmem:[#allocation11 + $0x178] sm:$0xff]
    %v784 = vld [vmem:[#allocation11 + $0x180] sm:$0xff]
    %v785 = vld [vmem:[#allocation11 + $0x188] sm:$0xff]
    %v786 = vld [vmem:[#allocation11 + $0x190] sm:$0xff]
    %v787 = vld [vmem:[#allocation11 + $0x198] sm:$0xff]
    %v788 = vld [vmem:[#allocation11 + $0x1a0] sm:$0xff]
    %v789 = vld [vmem:[#allocation11 + $0x1a8] sm:$0xff]
    %v790 = vld [vmem:[#allocation11 + $0x1b0] sm:$0xff]
    %v791 = vld [vmem:[#allocation11 + $0x1b8] sm:$0xff]
    %v792 = vld [vmem:[#allocation11 + $0x1c0] sm:$0xff]
    %v793 = vld [vmem:[#allocation11 + $0x1c8] sm:$0xff]
    %v794 = vld [vmem:[#allocation11 + $0x1d0] sm:$0xff]
    %v795 = vld [vmem:[#allocation11 + $0x1d8] sm:$0xff]
    %v796 = vld [vmem:[#allocation11 + $0x1e0] sm:$0xff]
    %v797 = vld [vmem:[#allocation11 + $0x1e8] sm:$0xff]
    %v798 = vld [vmem:[#allocation11 + $0x1f0] sm:$0xff]
    %v799 = vld [vmem:[#allocation11 + $0x1f8] sm:$0xff]
    %v800 = vld [vmem:[%s6] sm:$0x3]
    %v802 = vperm.slane %v800, 0
    %v803 = vperm.slane %v800, 1
    %v870 = vunpack.c.l.b16 %v736
    %v871 = vunpack.c.h.b16 %v736
    %v872 = vunpack.c.l.b16 %v737
    %v873 = vunpack.c.h.b16 %v737
    %v874 = vunpack.c.l.b16 %v738
    %v875 = vunpack.c.h.b16 %v738
    %v876 = vunpack.c.l.b16 %v739
    %v877 = vunpack.c.h.b16 %v739
    %v878 = vunpack.c.l.b16 %v740
    %v879 = vunpack.c.h.b16 %v740
    %v880 = vunpack.c.l.b16 %v741
    %v881 = vunpack.c.h.b16 %v741
    %v882 = vunpack.c.l.b16 %v742
    %v883 = vunpack.c.h.b16 %v742
    %v884 = vunpack.c.l.b16 %v743
    %v885 = vunpack.c.h.b16 %v743
    %v886 = vunpack.c.l.b16 %v744
    %v887 = vunpack.c.h.b16 %v744
    %v888 = vunpack.c.l.b16 %v745
    %v889 = vunpack.c.h.b16 %v745
    %v890 = vunpack.c.l.b16 %v746
    %v891 = vunpack.c.h.b16 %v746
    %v892 = vunpack.c.l.b16 %v747
    %v893 = vunpack.c.h.b16 %v747
    %v894 = vunpack.c.l.b16 %v748
    %v895 = vunpack.c.h.b16 %v748
    %v896 = vunpack.c.l.b16 %v749
    %v897 = vunpack.c.h.b16 %v749
    %v898 = vunpack.c.l.b16 %v750
    %v899 = vunpack.c.h.b16 %v750
    %v900 = vunpack.c.l.b16 %v751
    %v901 = vunpack.c.h.b16 %v751
    %v902 = vunpack.c.l.b16 %v752
    %v903 = vunpack.c.h.b16 %v752
    %v904 = vunpack.c.l.b16 %v753
    %v905 = vunpack.c.h.b16 %v753
    %v906 = vunpack.c.l.b16 %v754
    %v907 = vunpack.c.h.b16 %v754
    %v908 = vunpack.c.l.b16 %v755
    %v909 = vunpack.c.h.b16 %v755
    %v910 = vunpack.c.l.b16 %v756
    %v911 = vunpack.c.h.b16 %v756
    %v912 = vunpack.c.l.b16 %v757
    %v913 = vunpack.c.h.b16 %v757
    %v914 = vunpack.c.l.b16 %v758
    %v915 = vunpack.c.h.b16 %v758
    %v916 = vunpack.c.l.b16 %v759
    %v917 = vunpack.c.h.b16 %v759
    %v918 = vunpack.c.l.b16 %v760
    %v919 = vunpack.c.h.b16 %v760
    %v920 = vunpack.c.l.b16 %v761
    %v921 = vunpack.c.h.b16 %v761
    %v922 = vunpack.c.l.b16 %v762
    %v923 = vunpack.c.h.b16 %v762
    %v924 = vunpack.c.l.b16 %v763
    %v925 = vunpack.c.h.b16 %v763
    %v926 = vunpack.c.l.b16 %v764
    %v927 = vunpack.c.h.b16 %v764
    %v928 = vunpack.c.l.b16 %v765
    %v929 = vunpack.c.h.b16 %v765
    %v930 = vunpack.c.l.b16 %v766
    %v931 = vunpack.c.h.b16 %v766
    %v932 = vunpack.c.l.b16 %v767
    %v933 = vunpack.c.h.b16 %v767
    %v934 = vunpack.c.l.b16 %v768
    %v935 = vunpack.c.h.b16 %v768
    %v936 = vunpack.c.l.b16 %v769
    %v937 = vunpack.c.h.b16 %v769
    %v938 = vunpack.c.l.b16 %v770
    %v939 = vunpack.c.h.b16 %v770
    %v940 = vunpack.c.l.b16 %v771
    %v941 = vunpack.c.h.b16 %v771
    %v942 = vunpack.c.l.b16 %v772
    %v943 = vunpack.c.h.b16 %v772
    %v944 = vunpack.c.l.b16 %v773
    %v945 = vunpack.c.h.b16 %v773
    %v946 = vunpack.c.l.b16 %v774
    %v947 = vunpack.c.h.b16 %v774
    %v948 = vunpack.c.l.b16 %v775
    %v949 = vunpack.c.h.b16 %v775
    %v950 = vunpack.c.l.b16 %v776
    %v951 = vunpack.c.h.b16 %v776
    %v952 = vunpack.c.l.b16 %v777
    %v953 = vunpack.c.h.b16 %v777
    %v954 = vunpack.c.l.b16 %v778
    %v955 = vunpack.c.h.b16 %v778
    %v956 = vunpack.c.l.b16 %v779
    %v957 = vunpack.c.h.b16 %v779
    %v958 = vunpack.c.l.b16 %v780
    %v959 = vunpack.c.h.b16 %v780
    %v960 = vunpack.c.l.b16 %v781
    %v961 = vunpack.c.h.b16 %v781
    %v962 = vunpack.c.l.b16 %v782
    %v963 = vunpack.c.h.b16 %v782
    %v964 = vunpack.c.l.b16 %v783
    %v965 = vunpack.c.h.b16 %v783
    %v966 = vunpack.c.l.b16 %v784
    %v967 = vunpack.c.h.b16 %v784
    %v968 = vunpack.c.l.b16 %v785
    %v969 = vunpack.c.h.b16 %v785
    %v970 = vunpack.c.l.b16 %v786
    %v971 = vunpack.c.h.b16 %v786
    %v972 = vunpack.c.l.b16 %v787
    %v973 = vunpack.c.h.b16 %v787
    %v974 = vunpack.c.l.b16 %v788
    %v975 = vunpack.c.h.b16 %v788
    %v976 = vunpack.c.l.b16 %v789
    %v977 = vunpack.c.h.b16 %v789
    %v978 = vunpack.c.l.b16 %v790
    %v979 = vunpack.c.h.b16 %v790
    %v980 = vunpack.c.l.b16 %v791
    %v981 = vunpack.c.h.b16 %v791
    %v982 = vunpack.c.l.b16 %v792
    %v983 = vunpack.c.h.b16 %v792
    %v984 = vunpack.c.l.b16 %v793
    %v985 = vunpack.c.h.b16 %v793
    %v986 = vunpack.c.l.b16 %v794
    %v987 = vunpack.c.h.b16 %v794
    %v988 = vunpack.c.l.b16 %v795
    %v989 = vunpack.c.h.b16 %v795
    %v990 = vunpack.c.l.b16 %v796
    %v991 = vunpack.c.h.b16 %v796
    %v992 = vunpack.c.l.b16 %v797
    %v993 = vunpack.c.h.b16 %v797
    %v994 = vunpack.c.l.b16 %v798
    %v995 = vunpack.c.h.b16 %v798
    %v996 = vunpack.c.l.b16 %v799
    %v997 = vunpack.c.h.b16 %v799
    %v998 = vpack.c.b16 %v872, %v870
    %v999 = vpack.c.b16 %v873, %v871
    %v1000 = vpack.c.b16 %v876, %v874
    %v1001 = vpack.c.b16 %v877, %v875
    %v1002 = vpack.c.b16 %v880, %v878
    %v1003 = vpack.c.b16 %v881, %v879
    %v1004 = vpack.c.b16 %v884, %v882
    %v1005 = vpack.c.b16 %v885, %v883
    %v1006 = vpack.c.b16 %v888, %v886
    %v1007 = vpack.c.b16 %v889, %v887
    %v1008 = vpack.c.b16 %v892, %v890
    %v1009 = vpack.c.b16 %v893, %v891
    %v1010 = vpack.c.b16 %v896, %v894
    %v1011 = vpack.c.b16 %v897, %v895
    %v1012 = vpack.c.b16 %v900, %v898
    %v1013 = vpack.c.b16 %v901, %v899
    %v1014 = vpack.c.b16 %v904, %v902
    %v1015 = vpack.c.b16 %v905, %v903
    %v1016 = vpack.c.b16 %v908, %v906
    %v1017 = vpack.c.b16 %v909, %v907
    %v1018 = vpack.c.b16 %v912, %v910
    %v1019 = vpack.c.b16 %v913, %v911
    %v1020 = vpack.c.b16 %v916, %v914
    %v1021 = vpack.c.b16 %v917, %v915
    %v1022 = vpack.c.b16 %v920, %v918
    %v1023 = vpack.c.b16 %v921, %v919
    %v1024 = vpack.c.b16 %v924, %v922
    %v1025 = vpack.c.b16 %v925, %v923
    %v1026 = vpack.c.b16 %v928, %v926
    %v1027 = vpack.c.b16 %v929, %v927
    %v1028 = vpack.c.b16 %v932, %v930
    %v1029 = vpack.c.b16 %v933, %v931
    %v1030 = vpack.c.b16 %v936, %v934
    %v1031 = vpack.c.b16 %v937, %v935
    %v1032 = vpack.c.b16 %v940, %v938
    %v1033 = vpack.c.b16 %v941, %v939
    %v1034 = vpack.c.b16 %v944, %v942
    %v1035 = vpack.c.b16 %v945, %v943
    %v1036 = vpack.c.b16 %v948, %v946
    %v1037 = vpack.c.b16 %v949, %v947
    %v1038 = vpack.c.b16 %v952, %v950
    %v1039 = vpack.c.b16 %v953, %v951
    %v1040 = vpack.c.b16 %v956, %v954
    %v1041 = vpack.c.b16 %v957, %v955
    %v1042 = vpack.c.b16 %v960, %v958
    %v1043 = vpack.c.b16 %v961, %v959
    %v1044 = vpack.c.b16 %v964, %v962
    %v1045 = vpack.c.b16 %v965, %v963
    %v1046 = vpack.c.b16 %v968, %v966
    %v1047 = vpack.c.b16 %v969, %v967
    %v1048 = vpack.c.b16 %v972, %v970
    %v1049 = vpack.c.b16 %v973, %v971
    %v1050 = vpack.c.b16 %v976, %v974
    %v1051 = vpack.c.b16 %v977, %v975
    %v1052 = vpack.c.b16 %v980, %v978
    %v1053 = vpack.c.b16 %v981, %v979
    %v1054 = vpack.c.b16 %v984, %v982
    %v1055 = vpack.c.b16 %v985, %v983
    %v1056 = vpack.c.b16 %v988, %v986
    %v1057 = vpack.c.b16 %v989, %v987
    %v1058 = vpack.c.b16 %v992, %v990
    %v1059 = vpack.c.b16 %v993, %v991
    %v1060 = vpack.c.b16 %v996, %v994
    %v1061 = vpack.c.b16 %v997, %v995
    %1126 = vmatpush.bf16.msra.mxu0 %v1012
    %1127 = vmatpush.bf16.msra.mxu0 %v1010
    %1128 = vmatpush.bf16.msra.mxu0 %v1008
    %1129 = vmatpush.bf16.msra.mxu0 %v1006
    %1130 = vmatpush.bf16.msra.mxu0 %v1004
    %1131 = vmatpush.bf16.msra.mxu0 %v1002
    %1132 = vmatpush.bf16.msra.mxu0 %v1000
    %1133 = vmatpush.bf16.msra.mxu0 %v998
    %1134 = vmatmul.bf16.gmra.mxu0 %v732
    %v1135 = vpop.f32.mrf.mxu0
    %v1136 = vadd.f32 %v802, %v1135
    %v1137 = vpop.f32.mrf.mxu0
    %1138 = vdwg.mxu0
    %1139 = vmatpush.bf16.msra.mxu0 %v1028
    %1140 = vmatpush.bf16.msra.mxu0 %v1026
    %1141 = vmatpush.bf16.msra.mxu0 %v1024
    %1142 = vmatpush.bf16.msra.mxu0 %v1022
    %1143 = vmatpush.bf16.msra.mxu0 %v1020
    %1144 = vmatpush.bf16.msra.mxu0 %v1018
    %1145 = vmatpush.bf16.msra.mxu0 %v1016
    %1146 = vmatpush.bf16.msra.mxu0 %v1014
    %1147 = vmatmul.bf16.gmra.mxu0 %v733
    %v1148 = vpop.f32.mrf.mxu0
    %v1149 = vadd.f32 %v1136, %v1148
    %v1150 = vpop.f32.mrf.mxu0
    %1151 = vdwg.mxu0
    %1152 = vmatpush.bf16.msra.mxu0 %v1044
    %1153 = vmatpush.bf16.msra.mxu0 %v1042
    %1154 = vmatpush.bf16.msra.mxu0 %v1040
    %1155 = vmatpush.bf16.msra.mxu0 %v1038
    %1156 = vmatpush.bf16.msra.mxu0 %v1036
    %1157 = vmatpush.bf16.msra.mxu0 %v1034
    %1158 = vmatpush.bf16.msra.mxu0 %v1032
    %1159 = vmatpush.bf16.msra.mxu0 %v1030
    %1160 = vmatmul.bf16.gmra.mxu0 %v734
    %v1161 = vpop.f32.mrf.mxu0
    %v1162 = vadd.f32 %v1149, %v1161
    %v1163 = vpop.f32.mrf.mxu0
    %1164 = vdwg.mxu0
    %1165 = vmatpush.bf16.msra.mxu0 %v1060
    %1166 = vmatpush.bf16.msra.mxu0 %v1058
    %1167 = vmatpush.bf16.msra.mxu0 %v1056
    %1168 = vmatpush.bf16.msra.mxu0 %v1054
    %1169 = vmatpush.bf16.msra.mxu0 %v1052
    %1170 = vmatpush.bf16.msra.mxu0 %v1050
    %1171 = vmatpush.bf16.msra.mxu0 %v1048
    %1172 = vmatpush.bf16.msra.mxu0 %v1046
    %1173 = vmatmul.bf16.gmra.mxu0 %v735
    %v1174 = vpop.f32.mrf.mxu0
    %v1175 = vadd.f32 %v1162, %v1174
    %v1176 = vpop.f32.mrf.mxu0
    %1177 = vdwg.mxu0
    %1178 = vmatpush.bf16.msra.mxu0 %v1013
    %1179 = vmatpush.bf16.msra.mxu0 %v1011
    %1180 = vmatpush.bf16.msra.mxu0 %v1009
    %1181 = vmatpush.bf16.msra.mxu0 %v1007
    %1182 = vmatpush.bf16.msra.mxu0 %v1005
    %1183 = vmatpush.bf16.msra.mxu0 %v1003
    %1184 = vmatpush.bf16.msra.mxu0 %v1001
    %1185 = vmatpush.bf16.msra.mxu0 %v999
    %1186 = vmatmul.bf16.gmra.mxu0 %v732
    %v1187 = vpop.f32.mrf.mxu0
    %v1188 = vadd.f32 %v803, %v1187
    %v1189 = vpop.f32.mrf.mxu0
    %1190 = vdwg.mxu0
    %1191 = vmatpush.bf16.msra.mxu0 %v1029
    %1192 = vmatpush.bf16.msra.mxu0 %v1027
    %1193 = vmatpush.bf16.msra.mxu0 %v1025
    %1194 = vmatpush.bf16.msra.mxu0 %v1023
    %1195 = vmatpush.bf16.msra.mxu0 %v1021
    %1196 = vmatpush.bf16.msra.mxu0 %v1019
    %1197 = vmatpush.bf16.msra.mxu0 %v1017
    %1198 = vmatpush.bf16.msra.mxu0 %v1015
    %1199 = vmatmul.bf16.gmra.mxu0 %v733
    %v1200 = vpop.f32.mrf.mxu0
    %v1201 = vadd.f32 %v1188, %v1200
    %v1202 = vpop.f32.mrf.mxu0
    %1203 = vdwg.mxu0
    %1204 = vmatpush.bf16.msra.mxu0 %v1045
    %1205 = vmatpush.bf16.msra.mxu0 %v1043
    %1206 = vmatpush.bf16.msra.mxu0 %v1041
    %1207 = vmatpush.bf16.msra.mxu0 %v1039
    %1208 = vmatpush.bf16.msra.mxu0 %v1037
    %1209 = vmatpush.bf16.msra.mxu0 %v1035
    %1210 = vmatpush.bf16.msra.mxu0 %v1033
    %1211 = vmatpush.bf16.msra.mxu0 %v1031
    %1212 = vmatmul.bf16.gmra.mxu0 %v734
    %v1213 = vpop.f32.mrf.mxu0
    %v1214 = vadd.f32 %v1201, %v1213
    %v1215 = vpop.f32.mrf.mxu0
    %1216 = vdwg.mxu0
    %1217 = vmatpush.bf16.msra.mxu0 %v1061
    %1218 = vmatpush.bf16.msra.mxu0 %v1059
    %1219 = vmatpush.bf16.msra.mxu0 %v1057
    %1220 = vmatpush.bf16.msra.mxu0 %v1055
    %1221 = vmatpush.bf16.msra.mxu0 %v1053
    %1222 = vmatpush.bf16.msra.mxu0 %v1051
    %1223 = vmatpush.bf16.msra.mxu0 %v1049
    %1224 = vmatpush.bf16.msra.mxu0 %v1047
    %1225 = vmatmul.bf16.gmra.mxu0 %v735
    %v1226 = vpop.f32.mrf.mxu0
    %v1227 = vadd.f32 %v1214, %v1226
    %v1228 = vpop.f32.mrf.mxu0
    %1229 = vdwg.mxu0
    %v1230 = vmax.f32 %v1175, 0.0
    %v1231 = vmax.f32 %v1227, 0.0
    %v1232 = vpack.c.bf16 %v1230, %v1230
    %v1233 = vpack.c.bf16 %v1231, %v1231
    %v1234 = vld [vmem:[#allocation13] sm:$0xf]
    %v1235 = vld [vmem:[#allocation13 + $0x4] sm:$0xf]
    %v1236 = vld [vmem:[#allocation13 + $0x8] sm:$0xf]
    %v1237 = vld [vmem:[#allocation13 + $0xc] sm:$0xf]
    %v1238 = vld [vmem:[#allocation13 + $0x10] sm:$0xf]
    %v1239 = vld [vmem:[#allocation13 + $0x14] sm:$0xf]
    %v1240 = vld [vmem:[#allocation13 + $0x18] sm:$0xf]
    %v1241 = vld [vmem:[#allocation13 + $0x1c] sm:$0xf]
    %v1242 = vld [vmem:[#allocation13 + $0x20] sm:$0xf]
    %v1243 = vld [vmem:[#allocation13 + $0x24] sm:$0xf]
    %v1244 = vld [vmem:[#allocation13 + $0x28] sm:$0xf]
    %v1245 = vld [vmem:[#allocation13 + $0x2c] sm:$0xf]
    %v1246 = vld [vmem:[#allocation13 + $0x30] sm:$0xf]
    %v1247 = vld [vmem:[#allocation13 + $0x34] sm:$0xf]
    %v1248 = vld [vmem:[#allocation13 + $0x38] sm:$0xf]
    %v1249 = vld [vmem:[#allocation13 + $0x3c] sm:$0xf]
    %v1250 = vld [vmem:[#allocation13 + $0x40] sm:$0xf]
    %v1251 = vld [vmem:[#allocation13 + $0x44] sm:$0xf]
    %v1252 = vld [vmem:[#allocation13 + $0x48] sm:$0xf]
    %v1253 = vld [vmem:[#allocation13 + $0x4c] sm:$0xf]
    %v1254 = vld [vmem:[#allocation13 + $0x50] sm:$0xf]
    %v1255 = vld [vmem:[#allocation13 + $0x54] sm:$0xf]
    %v1256 = vld [vmem:[#allocation13 + $0x58] sm:$0xf]
    %v1257 = vld [vmem:[#allocation13 + $0x5c] sm:$0xf]
    %v1258 = vld [vmem:[#allocation13 + $0x60] sm:$0xf]
    %v1259 = vld [vmem:[#allocation13 + $0x64] sm:$0xf]
    %v1260 = vld [vmem:[#allocation13 + $0x68] sm:$0xf]
    %v1261 = vld [vmem:[#allocation13 + $0x6c] sm:$0xf]
    %v1262 = vld [vmem:[#allocation13 + $0x70] sm:$0xf]
    %v1263 = vld [vmem:[#allocation13 + $0x74] sm:$0xf]
    %v1264 = vld [vmem:[#allocation13 + $0x78] sm:$0xf]
    %v1265 = vld [vmem:[#allocation13 + $0x7c] sm:$0xf]
    %v1266 = vld [vmem:[%s8] sm:$0x1]
    %v1268 = vperm.slane %v1266, 0
    %v1302 = vunpack.c.l.b16 %v1234
    %v1303 = vunpack.c.l.b16 %v1235
    %v1304 = vunpack.c.l.b16 %v1236
    %v1305 = vunpack.c.l.b16 %v1237
    %v1306 = vunpack.c.l.b16 %v1238
    %v1307 = vunpack.c.l.b16 %v1239
    %v1308 = vunpack.c.l.b16 %v1240
    %v1309 = vunpack.c.l.b16 %v1241
    %v1310 = vunpack.c.l.b16 %v1242
    %v1311 = vunpack.c.l.b16 %v1243
    %v1312 = vunpack.c.l.b16 %v1244
    %v1313 = vunpack.c.l.b16 %v1245
    %v1314 = vunpack.c.l.b16 %v1246
    %v1315 = vunpack.c.l.b16 %v1247
    %v1316 = vunpack.c.l.b16 %v1248
    %v1317 = vunpack.c.l.b16 %v1249
    %v1318 = vunpack.c.l.b16 %v1250
    %v1319 = vunpack.c.l.b16 %v1251
    %v1320 = vunpack.c.l.b16 %v1252
    %v1321 = vunpack.c.l.b16 %v1253
    %v1322 = vunpack.c.l.b16 %v1254
    %v1323 = vunpack.c.l.b16 %v1255
    %v1324 = vunpack.c.l.b16 %v1256
    %v1325 = vunpack.c.l.b16 %v1257
    %v1326 = vunpack.c.l.b16 %v1258
    %v1327 = vunpack.c.l.b16 %v1259
    %v1328 = vunpack.c.l.b16 %v1260
    %v1329 = vunpack.c.l.b16 %v1261
    %v1330 = vunpack.c.l.b16 %v1262
    %v1331 = vunpack.c.l.b16 %v1263
    %v1332 = vunpack.c.l.b16 %v1264
    %v1333 = vunpack.c.l.b16 %v1265
    %v1334 = vpack.c.b16 %v1303, %v1302
    %v1335 = vpack.c.b16 %v1305, %v1304
    %v1336 = vpack.c.b16 %v1307, %v1306
    %v1337 = vpack.c.b16 %v1309, %v1308
    %v1338 = vpack.c.b16 %v1311, %v1310
    %v1339 = vpack.c.b16 %v1313, %v1312
    %v1340 = vpack.c.b16 %v1315, %v1314
    %v1341 = vpack.c.b16 %v1317, %v1316
    %v1342 = vpack.c.b16 %v1319, %v1318
    %v1343 = vpack.c.b16 %v1321, %v1320
    %v1344 = vpack.c.b16 %v1323, %v1322
    %v1345 = vpack.c.b16 %v1325, %v1324
    %v1346 = vpack.c.b16 %v1327, %v1326
    %v1347 = vpack.c.b16 %v1329, %v1328
    %v1348 = vpack.c.b16 %v1331, %v1330
    %v1349 = vpack.c.b16 %v1333, %v1332
    %1366 = vmatpush.bf16.msra.mxu0 %v1341
    %1367 = vmatpush.bf16.msra.mxu0 %v1340
    %1368 = vmatpush.bf16.msra.mxu0 %v1339
    %1369 = vmatpush.bf16.msra.mxu0 %v1338
    %1370 = vmatpush.bf16.msra.mxu0 %v1337
    %1371 = vmatpush.bf16.msra.mxu0 %v1336
    %1372 = vmatpush.bf16.msra.mxu0 %v1335
    %1373 = vmatpush.bf16.msra.mxu0 %v1334
    %1374 = vmatmul.bf16.gmra.mxu0 %v1232
    %v1375 = vpop.f32.mrf.mxu0
    %v1376 = vadd.f32 %v1268, %v1375
    %v1377 = vpop.f32.mrf.mxu0
    %1378 = vdwg.mxu0
    %1379 = vmatpush.bf16.msra.mxu0 %v1349
    %1380 = vmatpush.bf16.msra.mxu0 %v1348
    %1381 = vmatpush.bf16.msra.mxu0 %v1347
    %1382 = vmatpush.bf16.msra.mxu0 %v1346
    %1383 = vmatpush.bf16.msra.mxu0 %v1345
    %1384 = vmatpush.bf16.msra.mxu0 %v1344
    %1385 = vmatpush.bf16.msra.mxu0 %v1343
    %1386 = vmatpush.bf16.msra.mxu0 %v1342
    %1387 = vmatmul.bf16.gmra.mxu0 %v1233
    %v1388 = vpop.f32.mrf.mxu0
    %v1389 = vadd.f32 %v1376, %v1388
    %v1390 = vpop.f32.mrf.mxu0
    %1391 = vdwg.mxu0
    %1392 = vst [vmem:[#allocation14] sm:$0xff] %v1389
    // Predicated region
    $region66: #{tpu_custom_call.1} parent=1 // pred_check
      _
    $region67: #{tpu_custom_call.1} parent=1 // pred_check_branch
      %1394 = sbr.rel (0) target = $region69
    $region68: #{tpu_custom_call.1} parent=1 // pred_region
      %1396 = vsyncadd [#allocation4], 0
      %s1398 = sshll.u32 [#allocation14], 4
      %s1399 = int_to_ptr.vmem [resolvable:$true] %s1398
      %s1400 = sshll.u32 %s9, 4
      %s1401 = int_to_ptr.hbm [resolvable:$true] %s1400
      %1403 = dma.vmem_to_hbm [thread:$0]  %s1399, 128, %s1401, [#allocation4]
    $region69: #{tpu_custom_call.1} parent=1 // pred_fallthru
      _
    // Predicated region
    $region70: #{tpu_custom_call.1} parent=1 // pred_check
      _
    $region71: #{tpu_custom_call.1} parent=1 // pred_check_branch
      %1405 = sbr.rel (0) target = $region73
    $region72: #{tpu_custom_call.1} parent=1 // pred_region
      %1407 = dma.done [#allocation4], 128
    $region73: #{tpu_custom_call.1} parent=1 // pred_fallthru
      _
    %1408 = vsyncpa [#allocation3], 1
    %1409 = vsyncpa [#allocation6], 1
    %1410 = vsyncpa [#allocation9], 1
    %1411 = vsyncpa [#allocation12], 1
    %1412 = vsyncpa [#allocation4], 1

</llo_original>
